<compile_context>
chip_gen: v5e
topology: v5e:2x2
jax: 0.10.0
libtpu: 0.0.40
codegen_flags: <defaults>
</compile_context>

<pallas_src>
import jax
import jax.numpy as jnp
from jax.experimental import pallas as pl
from jax.experimental.pallas import tpu as pltpu

ALPHA = 0.2      # LeakyReLU negative slope
LANE = 128       # TPU lane width
DEFAULT_TILE_N = 1024


def _round_up(a, b):
    return (a + b - 1) // b * b


def _cdiv(a, b):
    return (a + b - 1) // b


# ---------------------------------------------------------------------------
# The single Pallas kernel: the HBM-bound hot loop  out = att * x
# (att is a (1, D) row broadcast over a (tile, D) row block of x).
# ---------------------------------------------------------------------------
def _scale_kernel(att_ref, x_ref, o_ref):
    o_ref[...] = (att_ref[...] * x_ref[...]).astype(o_ref.dtype)


def _vmem_budget_bytes():
    """Generation-aware VMEM budgeting (v7x: 64 MiB physical, v5e/v6e: 128)."""
    try:
        cap = pltpu.get_tpu_info().vmem_capacity_bytes
    except Exception:  # be conservative if the query is unavailable
        cap = 64 * 1024 * 1024
    limit = min(cap // 2, 100 * 1024 * 1024)   # scoped VMEM limit we request
    budget = (limit * 3) // 4                   # bytes for double-buffered tiles
    return limit, budget


def attention_forward(x, w0, b0, w1, b1, *, tile_n=DEFAULT_TILE_N):
    """Forward pass of the PyTorch `Attention` module.

    x: (N, D_in); w0: (D_in, H); b0: (1, H); w1: (H, D_out); b1: (1, D_out)
    (weights already transposed to "x @ W" convention).
    Requires D_out == D_in (implicit in the PyTorch `attention * x` broadcast).
    """
    n, d_in = x.shape
    h = w0.shape[1]
    d_out = w1.shape[1]
    assert w0.shape[0] == d_in and w1.shape[0] == h, "weight shape mismatch"
    assert d_out == d_in, (
        "Attention requires output_dim == input_dim for the final broadcast "
        f"(got output_dim={d_out}, input_dim={d_in})")

    f32 = jnp.float32
    out_dtype = jnp.result_type(x.dtype, f32)

    # ---- attention vector (1 x D): tiny, computed once in plain XLA -------
    xmean = jnp.sum(x.astype(f32), axis=0, keepdims=True) / n
    h1 = jnp.maximum(xmean @ w0.astype(f32) + b0.astype(f32), 0.0)       # ReLU
    h2 = h1 @ w1.astype(f32) + b1.astype(f32)
    lr = jnp.where(h2 > 0, h2, ALPHA * h2)                               # LeakyReLU
    att = jax.nn.softmax(lr, axis=1)                                     # exact, (1, D)

    # ---- lane-dense view of x when possible (no padding, no un-pad slice) -
    if d_in < LANE and LANE % d_in == 0 and n % (LANE // d_in) == 0:
        rpv = LANE // d_in                    # logical rows per 128-lane row
        x_view = x.reshape(n // rpv, LANE)    # row-major relabel of the same data
        att_view = jnp.tile(att, (1, rpv))    # (1, 128)
    else:
        rpv = 1
        x_view = x                            # unpadded; block last dim == D
        att_view = att
    n_rows, d_cols = x_view.shape

    # ---- row tiling: ragged last block, no row padding ---------------------
    x_item = jnp.dtype(x.dtype).itemsize
    o_item = jnp.dtype(out_dtype).itemsize
    sub = 8 * max(1, 4 // min(x_item, o_item))        # dtype-aware sublane pack
    vmem_limit, tile_budget = _vmem_budget_bytes()
    bytes_per_row = 2 * d_cols * (x_item + o_item)    # double-buffered in + out
    rows_by_vmem = max(sub, (tile_budget // bytes_per_row) // sub * sub)
    tile_cap = max(sub, min(tile_n, rows_by_vmem))
    # >= 2 parallel grid steps whenever possible (keeps both v7x TCs busy).
    min_tiles = 2 if n_rows >= 2 * sub else 1
    num_tiles = max(_cdiv(n_rows, tile_cap), min_tiles)
    tile = min(n_rows, _round_up(_cdiv(n_rows, num_tiles), sub))
    grid = (_cdiv(n_rows, tile),)

    out_view = pl.pallas_call(
        _scale_kernel,
        out_shape=jax.ShapeDtypeStruct((n_rows, d_cols), out_dtype),
        grid=grid,
        in_specs=[
            pl.BlockSpec((1, d_cols), lambda i: (0, 0)),      # att: VMEM resident
            pl.BlockSpec((tile, d_cols), lambda i: (i, 0)),   # x row tile
        ],
        out_specs=pl.BlockSpec((tile, d_cols), lambda i: (i, 0)),
        compiler_params=pltpu.CompilerParams(
            dimension_semantics=("parallel",),
            vmem_limit_bytes=vmem_limit,
        ),
        cost_estimate=pl.CostEstimate(
            flops=n_rows * d_cols,
            transcendentals=0,
            bytes_accessed=n_rows * d_cols * (x_item + o_item) + d_cols * 4,
        ),
    )(att_view.astype(f32), x_view)

    return out_view.reshape(n, d_in) if rpv > 1 else out_view


def attention_reference(x, w0, b0, w1, b1):
    """Pure-JAX reference reproducing the PyTorch forward."""
    x1 = jnp.sum(x.astype(jnp.float32), axis=0, keepdims=True) / x.shape[0]
    x2 = x1 @ w0.astype(jnp.float32) + b0
    x3 = jax.nn.relu(x2)
    x4 = x3 @ w1.astype(jnp.float32) + b1
    lr = jnp.where(x4 > 0, x4, ALPHA * x4)
    att = jax.nn.softmax(lr, axis=1)
    return att * x


if __name__ == "__main__":
    # Shapes consistent with the module: output_dim must equal input_dim.
    N, input_dim, hidden_dim, output_dim = 8, 32, 16, 32

    key = jax.random.PRNGKey(0)
    kx, kw0, kb0, kw1, kb1 = jax.random.split(key, 5)

    x = jax.random.normal(kx, (N, input_dim), dtype=jnp.float32)

    bound0 = 1.0 / (input_dim ** 0.5)
    w0 = jax.random.uniform(kw0, (input_dim, hidden_dim), jnp.float32, -bound0, bound0)
    b0 = jax.random.uniform(kb0, (1, hidden_dim), jnp.float32, -bound0, bound0)
    bound1 = 1.0 / (hidden_dim ** 0.5)
    w1 = jax.random.uniform(kw1, (hidden_dim, output_dim), jnp.float32, -bound1, bound1)
    b1 = jax.random.uniform(kb1, (1, output_dim), jnp.float32, -bound1, bound1)

    # Case 1: tiny — lane-dense reshape path, single grid step.
    out = attention_forward(x, w0, b0, w1, b1)
    jax.block_until_ready(out)
    ref = attention_reference(x, w0, b0, w1, b1)
    assert out.shape == (N, input_dim)
    assert jnp.allclose(out, ref, atol=1e-5, rtol=1e-5), "mismatch vs reference (case 1)"

    # Case 2: N not divisible by 128//D -> unpadded fallback path, ragged last
    # row block, masked (sub-128 lane) stores.
    N2 = 1037
    x2 = jax.random.normal(jax.random.PRNGKey(1), (N2, input_dim), dtype=jnp.float32)
    out2 = attention_forward(x2, w0, b0, w1, b1)
    jax.block_until_ready(out2)
    ref2 = attention_reference(x2, w0, b0, w1, b1)
    assert out2.shape == (N2, input_dim)
    assert jnp.allclose(out2, ref2, atol=1e-5, rtol=1e-5), "mismatch vs reference (case 2)"

    # Case 3: lane-dense reshape path with multiple parallel grid steps.
    N3 = 2048
    x3 = jax.random.normal(jax.random.PRNGKey(2), (N3, input_dim), dtype=jnp.float32)
    out3 = attention_forward(x3, w0, b0, w1, b1)
    jax.block_until_ready(out3)
    ref3 = attention_reference(x3, w0, b0, w1, b1)
    assert out3.shape == (N3, input_dim)
    assert jnp.allclose(out3, ref3, atol=1e-5, rtol=1e-5), "mismatch vs reference (case 3)"

    print("KERNEL_OK")
</pallas_src>

<mosaic_0001>
module attributes {stable_mosaic.version = 11 : i64} {
  func.func @_scale_kernel(%arg0: i32, %arg1: memref<1x128xf32, #tpu.memory_space<vmem>>, %arg2: memref<2x128xf32, #tpu.memory_space<vmem>>, %arg3: memref<2x128xf32, #tpu.memory_space<vmem>>) attributes {dimension_semantics = [#tpu.dimension_semantics<parallel>], iteration_bounds = array<i64: 1>, scalar_prefetch = 0 : i64, scratch_operands = 0 : i64, tpu.core_type = #tpu.core_type<tc>, window_params = [{pipeline_mode = #tpu.pipeline_mode<synchronous>, transform_indices = @transform_0, window_bounds = array<i64: 1, 128>}, {transform_indices = @transform_1, window_bounds = array<i64: 2, 128>}, {transform_indices = @transform_2, window_bounds = array<i64: 2, 128>}]} {
    %c0 = arith.constant 0 : index
    %c0_0 = arith.constant 0 : index
    %0 = vector.load %arg1[%c0, %c0_0] : memref<1x128xf32, #tpu.memory_space<vmem>>, vector<1x128xf32>
    %c0_1 = arith.constant 0 : index
    %c0_2 = arith.constant 0 : index
    %1 = vector.load %arg2[%c0_1, %c0_2] : memref<2x128xf32, #tpu.memory_space<vmem>>, vector<2x128xf32>
    %2 = vector.broadcast %0 : vector<1x128xf32> to vector<2x128xf32>
    %3 = arith.mulf %2, %1 : vector<2x128xf32>
    %c0_3 = arith.constant 0 : index
    %c0_4 = arith.constant 0 : index
    %4 = vector.load %arg3[%c0_3, %c0_4] : memref<2x128xf32, #tpu.memory_space<vmem>>, vector<2x128xf32>
    tpu.vector_store %arg3[%c0_3, %c0_4], %3 {strides = array<i32>} : memref<2x128xf32, #tpu.memory_space<vmem>>, vector<2x128xf32>,
    return
  }
  func.func @transform_0(%arg0: i32) -> (i32, i32) {
    %c0_i32 = arith.constant 0 : i32
    %c0_i32_0 = arith.constant 0 : i32
    %c0_i32_1 = arith.constant 0 : i32
    return %c0_i32, %c0_i32_0 : i32, i32
  }
  func.func @transform_1(%arg0: i32) -> (i32, i32) {
    %c0_i32 = arith.constant 0 : i32
    %c0_i32_0 = arith.constant 0 : i32
    return %arg0, %c0_i32 : i32, i32
  }
  func.func @transform_2(%arg0: i32) -> (i32, i32) {
    %c0_i32 = arith.constant 0 : i32
    %c0_i32_0 = arith.constant 0 : i32
    return %arg0, %c0_i32 : i32, i32
  }
}

</mosaic_0001>

<llo_original>
// kernel: tpu_custom_call.1
$region0: #{tpu_custom_call.1}
  #allocation0 [shape = 'u32[]', space=smem, size = 0x4, offset = 0x4, fixed_abs, tag = 'smem constant byte address 0x4 - core index']
  #allocation1 [shape = 'u32[72,128]{1,0:T(1,128)}', space=vmem, size = 0x9000, scoped, tag = 'internal scratch']
  %s0 = inlined_call_operand.hbm [shape: f32[1,128], index: 0, kind: input, shape index: {}]
  %s1 = inlined_call_operand.hbm [shape: f32[2,128], index: 1, kind: input, shape index: {}]
  %s2 = inlined_call_operand.hbm [shape: f32[2,128], index: 2, kind: output, shape index: {}]
  %s3 = sld [smem:[#allocation0]]
  $region26: #{tpu_custom_call.1} parent=0
    _
  %s5 = ssub.s32 1, %s3
  %s6 = scalar_select 0, %s5, %s3
  $region1: #{tpu_custom_call.1} parent=0
    #allocation2 [shape = 'u8[512]{0}', space=vmem, size = 0x400, scoped, tag = 'input window, operand 0, single buffered']
    #allocation3 [shape = 's32[1]{0}', space=sflag, size = 0x4, scoped, tag = 'scoped memory for tpu_custom_call.1']
    #allocation4 [shape = 's32[1]{0}', space=sflag, size = 0x4, scoped, tag = 'scoped memory for tpu_custom_call.1']
    #allocation5 [shape = 'u8[1024]{0}', space=vmem, size = 0x400, scoped, tag = 'input window, operand 1, single buffered']
    #allocation6 [shape = 's32[1]{0}', space=sflag, size = 0x4, scoped, tag = 'scoped memory for tpu_custom_call.1']
    #allocation7 [shape = 'u8[1024]{0}', space=vmem, size = 0x400, scoped, tag = 'output window, operand 0, single buffered']
    %7 = vsyncpa [#allocation3], 0
    %8 = vsyncpa [#allocation6], 0
    %9 = vsyncpa [#allocation4], 0
    // Predicated region
    $region2: #{tpu_custom_call.1} parent=1 // pred_check
      _
    $region3: #{tpu_custom_call.1} parent=1 // pred_check_branch
      %11 = sbr.rel (0) target = $region5
    $region4: #{tpu_custom_call.1} parent=1 // pred_region
      %13 = vsyncadd [#allocation3], 0
      %s15 = sshll.u32 %s0, 4
      %s16 = int_to_ptr.hbm [resolvable:$true] %s15
      %s17 = sshll.u32 [#allocation2], 4
      %s18 = int_to_ptr.vmem [resolvable:$true] %s17
      %20 = dma.hbm_to_vmem [thread:$0]  %s16, 16, %s18, [#allocation3]
    $region5: #{tpu_custom_call.1} parent=1 // pred_fallthru
      _
    // Predicated region
    $region6: #{tpu_custom_call.1} parent=1 // pred_check
      _
    $region7: #{tpu_custom_call.1} parent=1 // pred_check_branch
      %22 = sbr.rel (0) target = $region9
    $region8: #{tpu_custom_call.1} parent=1 // pred_region
      %24 = vsyncadd [#allocation6], 0
      %s26 = sshll.u32 %s1, 4
      %s27 = int_to_ptr.hbm [resolvable:$true] %s26
      %s28 = sshll.u32 [#allocation5], 4
      %s29 = int_to_ptr.vmem [resolvable:$true] %s28
      %31 = dma.hbm_to_vmem [thread:$0]  %s27, 32, %s29, [#allocation6]
    $region9: #{tpu_custom_call.1} parent=1 // pred_fallthru
      _
    // Predicated region
    $region10: #{tpu_custom_call.1} parent=1 // pred_check
      _
    $region11: #{tpu_custom_call.1} parent=1 // pred_check_branch
      %33 = sbr.rel (0) target = $region13
    $region12: #{tpu_custom_call.1} parent=1 // pred_region
      %35 = dma.done [#allocation3], 16
    $region13: #{tpu_custom_call.1} parent=1 // pred_fallthru
      _
    // Predicated region
    $region14: #{tpu_custom_call.1} parent=1 // pred_check
      _
    $region15: #{tpu_custom_call.1} parent=1 // pred_check_branch
      %37 = sbr.rel (0) target = $region17
    $region16: #{tpu_custom_call.1} parent=1 // pred_region
      %39 = dma.done [#allocation6], 32
    $region17: #{tpu_custom_call.1} parent=1 // pred_fallthru
      _
    %v40 = vld [vmem:[#allocation2] sm:$0x1]
    %v41 = vld [vmem:[#allocation5] sm:$0x3]
    %v43 = vperm.slane %v40, 0
    %v45 = vmul.f32 %v43, %v41
    %46 = vst [vmem:[#allocation7] sm:$0x3] %v45
    // Predicated region
    $region18: #{tpu_custom_call.1} parent=1 // pred_check
      _
    $region19: #{tpu_custom_call.1} parent=1 // pred_check_branch
      %48 = sbr.rel (0) target = $region21
    $region20: #{tpu_custom_call.1} parent=1 // pred_region
      %50 = vsyncadd [#allocation4], 0
      %s52 = sshll.u32 [#allocation7], 4
      %s53 = int_to_ptr.vmem [resolvable:$true] %s52
      %s54 = sshll.u32 %s2, 4
      %s55 = int_to_ptr.hbm [resolvable:$true] %s54
      %57 = dma.vmem_to_hbm [thread:$0]  %s53, 32, %s55, [#allocation4]
    $region21: #{tpu_custom_call.1} parent=1 // pred_fallthru
      _
    // Predicated region
    $region22: #{tpu_custom_call.1} parent=1 // pred_check
      _
    $region23: #{tpu_custom_call.1} parent=1 // pred_check_branch
      %59 = sbr.rel (0) target = $region25
    $region24: #{tpu_custom_call.1} parent=1 // pred_region
      %61 = dma.done [#allocation4], 32
    $region25: #{tpu_custom_call.1} parent=1 // pred_fallthru
      _
    %62 = vsyncpa [#allocation3], 1
    %63 = vsyncpa [#allocation6], 1
    %64 = vsyncpa [#allocation4], 1

</llo_original>
